<compile_context>
chip_gen: v7x
topology: tpu7x:2x2x1
jax: 0.10.0
libtpu: 0.0.40
codegen_flags: <defaults>
</compile_context>

<pallas_src>
import functools

import jax
import jax.numpy as jnp
from jax.experimental import pallas as pl
from jax.experimental.pallas import tpu as pltpu


_NEG_SLOPE = 0.01  # nn.LeakyReLU default negative_slope


def policy_head_kernel(feat_ref, scal_ref, w1_ref, b1_ref, w2_ref, b2_ref, out_ref):
    x = feat_ref[...]                                                  # [TB, F] bf16

    # Fused first layer (termination || block_size branches): one MXU pass, N = 2H.
    h = jnp.dot(x, w1_ref[...], preferred_element_type=jnp.float32) + b1_ref[...]
    h = jnp.where(h > 0, h, _NEG_SLOPE * h)                            # LeakyReLU
    # TODO(synk): Dropout(p=0.1) omitted (identity in eval mode).

    # Fused block-diagonal second layer -> [TB, 3] = [term_logit, bo0, bo1].
    y = jnp.dot(h.astype(w2_ref.dtype), w2_ref[...],
                preferred_element_type=jnp.float32) + b2_ref[...]

    # sigmoid / softplus over the whole [TB, 3] vreg (exp + recip live on the EUP).
    sig = pl.reciprocal(1.0 + jnp.exp(-y), approx=True)
    softplus = jnp.maximum(y, 0.0) + jnp.log1p(jnp.exp(-jnp.abs(y)))

    prev = scal_ref[:, 0:1]                                            # [TB, 1]
    prevu = scal_ref[:, 1:2]
    basis = scal_ref[:, 2:3]
    base = prev + prevu + 1.0
    absolute_size = base + (1.0 - sig[:, 1:2]) * (basis - base)        # [TB, 1]

    # Lane-masked select (no concatenate, single store):
    #   col 0 -> termination prob, col 1 -> absolute_size, col 2 -> softplus(bo1)
    col = jax.lax.broadcasted_iota(jnp.int32, y.shape, 1)
    out_ref[...] = jnp.where(col == 0, sig,
                             jnp.where(col == 1, absolute_size, softplus))


@functools.partial(jax.jit, static_argnames=())
def continuous_policy_head(features, previous_action, basis_dim,
                           previous_action_unmodified, params):
    """Returns (termination_prob [B], block_size_logits [B, 2])."""
    B, F = features.shape
    f32 = jnp.float32
    H2 = params["w1"].shape[1]                                         # 2 * hidden_dim

    # Batch tile: multiple of 8 sublanes; large tiles amortize per-step overhead.
    # Kept well under the 32 MiB scoped-VMEM default (safe for v7x's 64 MiB VMEM).
    TB = min(512, pl.cdiv(B, 8) * 8)
    Bp = pl.cdiv(B, TB) * TB

    feat = features.astype(jnp.bfloat16)                               # halve feature DMA
    scal = jnp.stack(
        [previous_action, previous_action_unmodified, basis_dim], axis=1
    ).astype(f32)                                                      # [B, 3]
    if Bp != B:
        feat = jnp.pad(feat, ((0, Bp - B), (0, 0)))
        scal = jnp.pad(scal, ((0, Bp - B), (0, 0)))

    out = pl.pallas_call(
        policy_head_kernel,
        out_shape=jax.ShapeDtypeStruct((Bp, 3), f32),
        grid_spec=pltpu.PrefetchScalarGridSpec(
            num_scalar_prefetch=0,
            grid=(Bp // TB,),
            in_specs=[
                pl.BlockSpec((TB, F), lambda i: (i, 0)),   # features: double-buffered
                pl.BlockSpec((TB, 3), lambda i: (i, 0)),   # packed per-row scalars
                pl.BlockSpec((F, H2), lambda i: (0, 0)),   # fused W1: VMEM resident
                pl.BlockSpec((1, H2), lambda i: (0, 0)),   # fused b1
                pl.BlockSpec((H2, 3), lambda i: (0, 0)),   # block-diag W2
                pl.BlockSpec((1, 3), lambda i: (0, 0)),    # fused b2
            ],
            out_specs=pl.BlockSpec((TB, 3), lambda i: (i, 0)),
        ),
        compiler_params=pltpu.CompilerParams(
            dimension_semantics=("parallel",)),
    )(feat, scal, params["w1"], params["b1"], params["w2"], params["b2"])

    out = out[:B]
    termination_prob = out[:, 0]          # nn.Flatten(-2) on [B, 1] -> [B]
    block_size_logits = out[:, 1:3]       # [B, 2] = [absolute_size, softplus]
    return termination_prob, block_size_logits


def init_params(key, feature_dim, hidden_dim):
    """PyTorch-style uniform init; branch weights fused at init time (zero per-call cost)."""
    ks = jax.random.split(key, 8)

    def lin(kw, kb, fan_in, fan_out):
        bound = 1.0 / jnp.sqrt(fan_in)
        w = jax.random.uniform(kw, (fan_in, fan_out), jnp.float32, -bound, bound)
        b = jax.random.uniform(kb, (fan_out,), jnp.float32, -bound, bound)
        return w, b

    w1t, b1t = lin(ks[0], ks[1], feature_dim, hidden_dim)   # termination L1
    w2t, b2t = lin(ks[2], ks[3], hidden_dim, 1)             # termination L2
    w1b, b1b = lin(ks[4], ks[5], feature_dim, hidden_dim)   # block_size  L1
    w2b, b2b = lin(ks[6], ks[7], hidden_dim, 2)             # block_size  L2

    # First layers fused along output lanes: [F, 2H].
    w1 = jnp.concatenate([w1t, w1b], axis=1)
    b1 = jnp.concatenate([b1t, b1b], axis=0)[None, :]       # [1, 2H]

    # Second layers fused into a block-diagonal [2H, 3]:
    #   rows 0..H-1  -> col 0   (termination logit)
    #   rows H..2H-1 -> cols 1,2 (block-size outputs)
    w2 = jnp.zeros((2 * hidden_dim, 3), jnp.float32)
    w2 = w2.at[:hidden_dim, 0:1].set(w2t)
    w2 = w2.at[hidden_dim:, 1:3].set(w2b)
    b2 = jnp.concatenate([b2t, b2b], axis=0)[None, :]       # [1, 3]

    return dict(w1=w1.astype(jnp.bfloat16), b1=b1,
                w2=w2.astype(jnp.bfloat16), b2=b2)


if __name__ == "__main__":
    B, feature_dim, hidden_dim = 8, 32, 128

    key = jax.random.PRNGKey(0)
    k_feat, k_prev, k_prevu, k_basis, k_param = jax.random.split(key, 5)

    features = jax.random.normal(k_feat, (B, feature_dim), jnp.float32)
    previous_action = jax.random.uniform(k_prev, (B,), jnp.float32, 0.0, 4.0)
    previous_action_unmodified = jax.random.uniform(k_prevu, (B,), jnp.float32, 0.0, 4.0)
    basis_dim = jax.random.uniform(k_basis, (B,), jnp.float32, 16.0, 64.0)

    params = init_params(k_param, feature_dim, hidden_dim)

    term, logits = continuous_policy_head(
        features, previous_action, basis_dim, previous_action_unmodified, params)
    jax.block_until_ready((term, logits))

    assert term.shape == (B,)
    assert logits.shape == (B, 2)
    assert bool(jnp.all(jnp.isfinite(term)))
    assert bool(jnp.all(jnp.isfinite(logits)))
    assert bool(jnp.all((term >= 0.0) & (term <= 1.0)))
    print("KERNEL_OK")
</pallas_src>

<mosaic_0001>
module attributes {stable_mosaic.version = 11 : i64} {
  func.func @policy_head_kernel(%arg0: i32, %arg1: memref<8x32xbf16, #tpu.memory_space<vmem>>, %arg2: memref<8x3xf32, #tpu.memory_space<vmem>>, %arg3: memref<32x256xbf16, #tpu.memory_space<vmem>>, %arg4: memref<1x256xf32, #tpu.memory_space<vmem>>, %arg5: memref<256x3xbf16, #tpu.memory_space<vmem>>, %arg6: memref<1x3xf32, #tpu.memory_space<vmem>>, %arg7: memref<8x3xf32, #tpu.memory_space<vmem>>) attributes {dimension_semantics = [#tpu.dimension_semantics<parallel>], iteration_bounds = array<i64: 1>, scalar_prefetch = 0 : i64, scratch_operands = 0 : i64, tpu.core_type = #tpu.core_type<tc>, window_params = [{transform_indices = @transform_0, window_bounds = array<i64: 8, 32>}, {transform_indices = @transform_1, window_bounds = array<i64: 8, 3>}, {pipeline_mode = #tpu.pipeline_mode<synchronous>, transform_indices = @transform_2, window_bounds = array<i64: 32, 256>}, {pipeline_mode = #tpu.pipeline_mode<synchronous>, transform_indices = @transform_3, window_bounds = array<i64: 1, 256>}, {pipeline_mode = #tpu.pipeline_mode<synchronous>, transform_indices = @transform_4, window_bounds = array<i64: 256, 3>}, {pipeline_mode = #tpu.pipeline_mode<synchronous>, transform_indices = @transform_5, window_bounds = array<i64: 1, 3>}, {transform_indices = @transform_6, window_bounds = array<i64: 8, 3>}]} {
    %c0 = arith.constant 0 : index
    %c0_0 = arith.constant 0 : index
    %0 = vector.load %arg1[%c0, %c0_0] : memref<8x32xbf16, #tpu.memory_space<vmem>>, vector<8x32xbf16>
    %c0_1 = arith.constant 0 : index
    %c0_2 = arith.constant 0 : index
    %1 = vector.load %arg3[%c0_1, %c0_2] : memref<32x256xbf16, #tpu.memory_space<vmem>>, vector<32x256xbf16>
    %cst = arith.constant dense<0.000000e+00> : vector<8x256xf32>
    %2 = tpu.matmul %0, %1, %cst {dimension_numbers = #tpu.dot_dimension_numbers<[1], [0], [0], [1], [0, 0, 1, 1], [], []>} : vector<8x32xbf16>, vector<32x256xbf16>, vector<8x256xf32> -> vector<8x256xf32>
    %c0_3 = arith.constant 0 : index
    %c0_4 = arith.constant 0 : index
    %3 = vector.load %arg4[%c0_3, %c0_4] : memref<1x256xf32, #tpu.memory_space<vmem>>, vector<1x256xf32>
    %4 = vector.broadcast %3 : vector<1x256xf32> to vector<8x256xf32>
    %5 = arith.addf %2, %4 : vector<8x256xf32>
    %cst_5 = arith.constant 0.000000e+00 : f32
    %6 = vector.broadcast %cst_5 : f32 to vector<8x256xf32>
    %7 = arith.cmpf ogt, %5, %6 : vector<8x256xf32>
    %cst_6 = arith.constant 0.00999999977 : f32
    %8 = vector.broadcast %cst_6 : f32 to vector<8x256xf32>
    %9 = arith.mulf %8, %5 : vector<8x256xf32>
    %10 = arith.select %7, %5, %9 : vector<8x256xi1>, vector<8x256xf32>
    %11 = arith.truncf %10 : vector<8x256xf32> to vector<8x256xbf16>
    %c0_7 = arith.constant 0 : index
    %c0_8 = arith.constant 0 : index
    %12 = vector.load %arg5[%c0_7, %c0_8] : memref<256x3xbf16, #tpu.memory_space<vmem>>, vector<256x3xbf16>
    %cst_9 = arith.constant dense<0.000000e+00> : vector<8x3xf32>
    %13 = tpu.matmul %11, %12, %cst_9 {dimension_numbers = #tpu.dot_dimension_numbers<[1], [0], [0], [1], [0, 0, 1, 1], [], []>} : vector<8x256xbf16>, vector<256x3xbf16>, vector<8x3xf32> -> vector<8x3xf32>
    %c0_10 = arith.constant 0 : index
    %c0_11 = arith.constant 0 : index
    %14 = vector.load %arg6[%c0_10, %c0_11] : memref<1x3xf32, #tpu.memory_space<vmem>>, vector<1x3xf32>
    %15 = vector.broadcast %14 : vector<1x3xf32> to vector<8x3xf32>
    %16 = arith.addf %13, %15 : vector<8x3xf32>
    %cst_12 = arith.constant 0.000000e+00 : f32
    %17 = vector.broadcast %cst_12 : f32 to vector<8x3xf32>
    %18 = arith.subf %17, %16 : vector<8x3xf32>
    %19 = math.exp %18 : vector<8x3xf32>
    %cst_13 = arith.constant 1.000000e+00 : f32
    %20 = vector.broadcast %cst_13 : f32 to vector<8x3xf32>
    %21 = arith.addf %20, %19 : vector<8x3xf32>
    %22 = tpu.reciprocal %21 {approx = true} : vector<8x3xf32> -> vector<8x3xf32>
    %cst_14 = arith.constant 0.000000e+00 : f32
    %23 = vector.broadcast %cst_14 : f32 to vector<8x3xf32>
    %24 = arith.maximumf %16, %23 : vector<8x3xf32>
    %25 = math.absf %16 : vector<8x3xf32>
    %cst_15 = arith.constant 0.000000e+00 : f32
    %26 = vector.broadcast %cst_15 : f32 to vector<8x3xf32>
    %27 = arith.subf %26, %25 : vector<8x3xf32>
    %28 = math.exp %27 : vector<8x3xf32>
    %29 = math.log1p %28 : vector<8x3xf32>
    %30 = arith.addf %24, %29 : vector<8x3xf32>
    %c0_16 = arith.constant 0 : index
    %c0_17 = arith.constant 0 : index
    %31 = vector.load %arg2[%c0_16, %c0_17] : memref<8x3xf32, #tpu.memory_space<vmem>>, vector<8x1xf32>
    %c0_18 = arith.constant 0 : index
    %c1 = arith.constant 1 : index
    %32 = vector.load %arg2[%c0_18, %c1] : memref<8x3xf32, #tpu.memory_space<vmem>>, vector<8x1xf32>
    %c0_19 = arith.constant 0 : index
    %c2 = arith.constant 2 : index
    %33 = vector.load %arg2[%c0_19, %c2] : memref<8x3xf32, #tpu.memory_space<vmem>>, vector<8x1xf32>
    %34 = arith.addf %31, %32 : vector<8x1xf32>
    %cst_20 = arith.constant 1.000000e+00 : f32
    %35 = vector.broadcast %cst_20 : f32 to vector<8x1xf32>
    %36 = arith.addf %34, %35 : vector<8x1xf32>
    %37 = vector.extract_strided_slice %22 {offsets = [0, 1], sizes = [8, 1], strides = [1, 1]} : vector<8x3xf32> to vector<8x1xf32>
    %cst_21 = arith.constant 1.000000e+00 : f32
    %38 = vector.broadcast %cst_21 : f32 to vector<8x1xf32>
    %39 = arith.subf %38, %37 : vector<8x1xf32>
    %40 = arith.subf %33, %36 : vector<8x1xf32>
    %41 = arith.mulf %39, %40 : vector<8x1xf32>
    %42 = arith.addf %36, %41 : vector<8x1xf32>
    %43 = tpu.iota {dimensions = array<i32: 1>} : vector<8x3xi32>
    %c0_i32 = arith.constant 0 : i32
    %44 = vector.broadcast %c0_i32 : i32 to vector<8x3xi32>
    %45 = arith.cmpi eq, %43, %44 : vector<8x3xi32>
    %c1_i32 = arith.constant 1 : i32
    %46 = vector.broadcast %c1_i32 : i32 to vector<8x3xi32>
    %47 = arith.cmpi eq, %43, %46 : vector<8x3xi32>
    %48 = vector.shape_cast %42 : vector<8x1xf32> to vector<8x1xf32>
    %49 = vector.broadcast %48 : vector<8x1xf32> to vector<8x3xf32>
    %50 = arith.select %47, %49, %30 : vector<8x3xi1>, vector<8x3xf32>
    %51 = arith.select %45, %22, %50 : vector<8x3xi1>, vector<8x3xf32>
    %c0_22 = arith.constant 0 : index
    %c0_23 = arith.constant 0 : index
    %52 = vector.load %arg7[%c0_22, %c0_23] : memref<8x3xf32, #tpu.memory_space<vmem>>, vector<8x3xf32>
    tpu.vector_store %arg7[%c0_22, %c0_23], %51 {strides = array<i32>} : memref<8x3xf32, #tpu.memory_space<vmem>>, vector<8x3xf32>,
    return
  }
  func.func @transform_0(%arg0: i32) -> (i32, i32) {
    %c0_i32 = arith.constant 0 : i32
    %c0_i32_0 = arith.constant 0 : i32
    return %arg0, %c0_i32 : i32, i32
  }
  func.func @transform_1(%arg0: i32) -> (i32, i32) {
    %c0_i32 = arith.constant 0 : i32
    %c0_i32_0 = arith.constant 0 : i32
    return %arg0, %c0_i32 : i32, i32
  }
  func.func @transform_2(%arg0: i32) -> (i32, i32) {
    %c0_i32 = arith.constant 0 : i32
    %c0_i32_0 = arith.constant 0 : i32
    %c0_i32_1 = arith.constant 0 : i32
    return %c0_i32, %c0_i32_0 : i32, i32
  }
  func.func @transform_3(%arg0: i32) -> (i32, i32) {
    %c0_i32 = arith.constant 0 : i32
    %c0_i32_0 = arith.constant 0 : i32
    %c0_i32_1 = arith.constant 0 : i32
    return %c0_i32, %c0_i32_0 : i32, i32
  }
  func.func @transform_4(%arg0: i32) -> (i32, i32) {
    %c0_i32 = arith.constant 0 : i32
    %c0_i32_0 = arith.constant 0 : i32
    %c0_i32_1 = arith.constant 0 : i32
    return %c0_i32, %c0_i32_0 : i32, i32
  }
  func.func @transform_5(%arg0: i32) -> (i32, i32) {
    %c0_i32 = arith.constant 0 : i32
    %c0_i32_0 = arith.constant 0 : i32
    %c0_i32_1 = arith.constant 0 : i32
    return %c0_i32, %c0_i32_0 : i32, i32
  }
  func.func @transform_6(%arg0: i32) -> (i32, i32) {
    %c0_i32 = arith.constant 0 : i32
    %c0_i32_0 = arith.constant 0 : i32
    return %arg0, %c0_i32 : i32, i32
  }
}

</mosaic_0001>

<llo_original>
// kernel: continuous_policy_head.1
$region0: #{continuous_policy_head.1}
  #allocation0 [shape = 'u32[]', space=smem, size = 0x4, offset = 0x4, fixed_abs, tag = 'smem constant byte address 0x4 - core index']
  #allocation1 [shape = 'u32[144,128]{1,0:T(1,128)}', space=vmem, size = 0x12000, scoped, tag = 'internal scratch']
  %s0 = inlined_call_operand.vmem [shape: bf16[8,32], index: 0, kind: input, shape index: {}]
  %s1 = inlined_call_operand.vmem [shape: f32[8,3], index: 1, kind: input, shape index: {}]
  %s2 = inlined_call_operand.vmem [shape: bf16[32,256], index: 2, kind: input, shape index: {}]
  %s3 = inlined_call_operand.vmem [shape: f32[1,256], index: 3, kind: input, shape index: {}]
  %s4 = inlined_call_operand.vmem [shape: bf16[256,3], index: 4, kind: input, shape index: {}]
  %s5 = inlined_call_operand.vmem [shape: f32[1,3], index: 5, kind: input, shape index: {}]
  %s6 = inlined_call_operand.vmem [shape: f32[8,3], index: 6, kind: output, shape index: {}]
  %s7 = sld [smem:[#allocation0]]
  $region34: #{continuous_policy_head.1} parent=0
    _
  %s9 = ssub.s32 1, %s7
  %s10 = scalar_select 0, %s9, %s7
  // Predicated region
  $region2: #{continuous_policy_head.1} parent=0 // pred_check
    _
  $region3: #{continuous_policy_head.1} parent=0 // pred_check_branch
    %12 = sbr.rel (0) target = $region5
  $region4: #{continuous_policy_head.1} parent=0 // pred_region
    _
  $region5: #{continuous_policy_head.1} parent=0 // pred_fallthru
    _
  // Predicated region
  $region6: #{continuous_policy_head.1} parent=0 // pred_check
    _
  $region7: #{continuous_policy_head.1} parent=0 // pred_check_branch
    %14 = sbr.rel (0) target = $region9
  $region8: #{continuous_policy_head.1} parent=0 // pred_region
    _
  $region9: #{continuous_policy_head.1} parent=0 // pred_fallthru
    _
  // Predicated region
  $region10: #{continuous_policy_head.1} parent=0 // pred_check
    _
  $region11: #{continuous_policy_head.1} parent=0 // pred_check_branch
    %16 = sbr.rel (0) target = $region13
  $region12: #{continuous_policy_head.1} parent=0 // pred_region
    _
  $region13: #{continuous_policy_head.1} parent=0 // pred_fallthru
    _
  // Predicated region
  $region14: #{continuous_policy_head.1} parent=0 // pred_check
    _
  $region15: #{continuous_policy_head.1} parent=0 // pred_check_branch
    %18 = sbr.rel (0) target = $region17
  $region16: #{continuous_policy_head.1} parent=0 // pred_region
    _
  $region17: #{continuous_policy_head.1} parent=0 // pred_fallthru
    _
  // Predicated region
  $region18: #{continuous_policy_head.1} parent=0 // pred_check
    _
  $region19: #{continuous_policy_head.1} parent=0 // pred_check_branch
    %20 = sbr.rel (0) target = $region21
  $region20: #{continuous_policy_head.1} parent=0 // pred_region
    _
  $region21: #{continuous_policy_head.1} parent=0 // pred_fallthru
    _
  // Predicated region
  $region22: #{continuous_policy_head.1} parent=0 // pred_check
    _
  $region23: #{continuous_policy_head.1} parent=0 // pred_check_branch
    %22 = sbr.rel (0) target = $region25
  $region24: #{continuous_policy_head.1} parent=0 // pred_region
    _
  $region25: #{continuous_policy_head.1} parent=0 // pred_fallthru
    _
  %v24 = vld [vmem:[%s0] sm:$0xf]
  %v25 = vld [vmem:[%s2] sm:$0xff]
  %v26 = vld [vmem:[%s2 + $0x8] sm:$0xff]
  %v27 = vld [vmem:[%s2 + $0x10] sm:$0xff]
  %v28 = vld [vmem:[%s2 + $0x18] sm:$0xff]
  %v29 = vld [vmem:[%s3] sm:$0x3]
  %v31 = vlaneseq
  %v32 = vshrl.u32 %v31, 7
  %v33 = vsub.s32 0, %v32
  %v34 = vrot.slane %v29, %v33
  %v35 = vlaneseq
  %v36 = vshrl.u32 %v35, 7
  %v37 = vsub.s32 1, %v36
  %v38 = vrot.slane %v29, %v37
  %v45 = vunpack.c.l.b16 %v25
  %v46 = vunpack.c.h.b16 %v25
  %v47 = vunpack.c.l.b16 %v26
  %v48 = vunpack.c.h.b16 %v26
  %v49 = vunpack.c.l.b16 %v27
  %v50 = vunpack.c.h.b16 %v27
  %v51 = vunpack.c.l.b16 %v28
  %v52 = vunpack.c.h.b16 %v28
  %v53 = vpack.c.b16 %v47, %v45
  %v54 = vpack.c.b16 %v48, %v46
  %v55 = vpack.c.b16 %v51, %v49
  %v56 = vpack.c.b16 %v52, %v50
  %vm61 = vcmask 261120
  %v63 = vsel %vm61, %v24, 0
  %65 = vmatprep.subr.bf16.mxu0 %v54
  %66 = vmatpush1.bf16.msra.mxu0 %v53
  %67 = vmatprep.subr.bf16.mxu0 %v56
  %68 = vmatpush1.bf16.msra.mxu0 %v55
  %69 = vmatprep.subr.bf16.mxu0 0
  %70 = vmatpush1.bf16.msra.mxu0 0
  %71 = vmatprep.subr.bf16.mxu0 0
  %72 = vmatpush1.bf16.msra.mxu0 0
  %73 = vmatprep.subr.bf16.mxu0 0
  %74 = vmatpush1.bf16.msra.mxu0 0
  %75 = vmatprep.subr.bf16.mxu0 0
  %76 = vmatpush1.bf16.msra.mxu0 0
  %77 = vmatprep.subr.bf16.mxu0 0
  %78 = vmatpush1.bf16.msra.mxu0 0
  %79 = vmatprep.subr.bf16.mxu0 0
  %80 = vmatpush1.bf16.msra.mxu0 0
  %81 = vmatprep.subr.bf16.mxu0 0
  %82 = vmatpush1.bf16.msra.mxu0 0
  %83 = vmatprep.subr.bf16.mxu0 0
  %84 = vmatpush1.bf16.msra.mxu0 0
  %85 = vmatprep.subr.bf16.mxu0 0
  %86 = vmatpush1.bf16.msra.mxu0 0
  %87 = vmatprep.subr.bf16.mxu0 0
  %88 = vmatpush1.bf16.msra.mxu0 0
  %89 = vmatprep.subr.bf16.mxu0 0
  %90 = vmatpush1.bf16.msra.mxu0 0
  %91 = vmatprep.subr.bf16.mxu0 0
  %92 = vmatpush1.bf16.msra.mxu0 0
  %93 = vmatprep.subr.bf16.mxu0 0
  %94 = vmatpush1.bf16.msra.mxu0 0
  %95 = vmatprep.subr.bf16.mxu0 0
  %96 = vmatpush1.bf16.msra.mxu0 0
  %97 = vmatprep.mubr.bf16.mxu0 0
  %98 = vmatmul.mubr.bf16.gmra.mrb[0].mxu0 %v63
  %v99 = vpop.f32.mrb[0].mxu0
  %v100 = vadd.f32 %v34, %v99
  %v101 = vpop.f32.mrb[0].mxu0
  %v102 = vadd.f32 %v38, %v101
  %v103 = vpop.f32.mrb[0].mxu0
  %v104 = vpop.f32.mrb[0].mxu0
  %105 = vdwg.mxu0
  %vm106 = vcmp.gt.f32.partialorder %v100, 0.0
  %vm107 = vcmp.gt.f32.partialorder %v102, 0.0
  %v108 = vmul.f32 %v100, 0.01
  %v109 = vmul.f32 %v102, 0.01
  %v110 = vsel %vm106, %v100, %v108
  %v111 = vsel %vm107, %v102, %v109
  %v112 = vpack.c.bf16 %v110, %v110
  %v113 = vpack.c.bf16 %v111, %v111
  %v114 = vld [vmem:[%s4] sm:$0xf]
  %v115 = vld [vmem:[%s4 + $0x4] sm:$0xf]
  %v116 = vld [vmem:[%s4 + $0x8] sm:$0xf]
  %v117 = vld [vmem:[%s4 + $0xc] sm:$0xf]
  %v118 = vld [vmem:[%s4 + $0x10] sm:$0xf]
  %v119 = vld [vmem:[%s4 + $0x14] sm:$0xf]
  %v120 = vld [vmem:[%s4 + $0x18] sm:$0xf]
  %v121 = vld [vmem:[%s4 + $0x1c] sm:$0xf]
  %v122 = vld [vmem:[%s4 + $0x20] sm:$0xf]
  %v123 = vld [vmem:[%s4 + $0x24] sm:$0xf]
  %v124 = vld [vmem:[%s4 + $0x28] sm:$0xf]
  %v125 = vld [vmem:[%s4 + $0x2c] sm:$0xf]
  %v126 = vld [vmem:[%s4 + $0x30] sm:$0xf]
  %v127 = vld [vmem:[%s4 + $0x34] sm:$0xf]
  %v128 = vld [vmem:[%s4 + $0x38] sm:$0xf]
  %v129 = vld [vmem:[%s4 + $0x3c] sm:$0xf]
  %v130 = vld [vmem:[%s4 + $0x40] sm:$0xf]
  %v131 = vld [vmem:[%s4 + $0x44] sm:$0xf]
  %v132 = vld [vmem:[%s4 + $0x48] sm:$0xf]
  %v133 = vld [vmem:[%s4 + $0x4c] sm:$0xf]
  %v134 = vld [vmem:[%s4 + $0x50] sm:$0xf]
  %v135 = vld [vmem:[%s4 + $0x54] sm:$0xf]
  %v136 = vld [vmem:[%s4 + $0x58] sm:$0xf]
  %v137 = vld [vmem:[%s4 + $0x5c] sm:$0xf]
  %v138 = vld [vmem:[%s4 + $0x60] sm:$0xf]
  %v139 = vld [vmem:[%s4 + $0x64] sm:$0xf]
  %v140 = vld [vmem:[%s4 + $0x68] sm:$0xf]
  %v141 = vld [vmem:[%s4 + $0x6c] sm:$0xf]
  %v142 = vld [vmem:[%s4 + $0x70] sm:$0xf]
  %v143 = vld [vmem:[%s4 + $0x74] sm:$0xf]
  %v144 = vld [vmem:[%s4 + $0x78] sm:$0xf]
  %v145 = vld [vmem:[%s4 + $0x7c] sm:$0xf]
  %v146 = vld [vmem:[%s5] sm:$0x1]
  %v148 = vlaneseq
  %v149 = vshrl.u32 %v148, 7
  %v150 = vsub.s32 0, %v149
  %v151 = vrot.slane %v146, %v150
  %v185 = vunpack.c.l.b16 %v114
  %v186 = vunpack.c.l.b16 %v115
  %v187 = vunpack.c.l.b16 %v116
  %v188 = vunpack.c.l.b16 %v117
  %v189 = vunpack.c.l.b16 %v118
  %v190 = vunpack.c.l.b16 %v119
  %v191 = vunpack.c.l.b16 %v120
  %v192 = vunpack.c.l.b16 %v121
  %v193 = vunpack.c.l.b16 %v122
  %v194 = vunpack.c.l.b16 %v123
  %v195 = vunpack.c.l.b16 %v124
  %v196 = vunpack.c.l.b16 %v125
  %v197 = vunpack.c.l.b16 %v126
  %v198 = vunpack.c.l.b16 %v127
  %v199 = vunpack.c.l.b16 %v128
  %v200 = vunpack.c.l.b16 %v129
  %v201 = vunpack.c.l.b16 %v130
  %v202 = vunpack.c.l.b16 %v131
  %v203 = vunpack.c.l.b16 %v132
  %v204 = vunpack.c.l.b16 %v133
  %v205 = vunpack.c.l.b16 %v134
  %v206 = vunpack.c.l.b16 %v135
  %v207 = vunpack.c.l.b16 %v136
  %v208 = vunpack.c.l.b16 %v137
  %v209 = vunpack.c.l.b16 %v138
  %v210 = vunpack.c.l.b16 %v139
  %v211 = vunpack.c.l.b16 %v140
  %v212 = vunpack.c.l.b16 %v141
  %v213 = vunpack.c.l.b16 %v142
  %v214 = vunpack.c.l.b16 %v143
  %v215 = vunpack.c.l.b16 %v144
  %v216 = vunpack.c.l.b16 %v145
  %v217 = vpack.c.b16 %v186, %v185
  %v218 = vpack.c.b16 %v188, %v187
  %v219 = vpack.c.b16 %v190, %v189
  %v220 = vpack.c.b16 %v192, %v191
  %v221 = vpack.c.b16 %v194, %v193
  %v222 = vpack.c.b16 %v196, %v195
  %v223 = vpack.c.b16 %v198, %v197
  %v224 = vpack.c.b16 %v200, %v199
  %v225 = vpack.c.b16 %v202, %v201
  %v226 = vpack.c.b16 %v204, %v203
  %v227 = vpack.c.b16 %v206, %v205
  %v228 = vpack.c.b16 %v208, %v207
  %v229 = vpack.c.b16 %v210, %v209
  %v230 = vpack.c.b16 %v212, %v211
  %v231 = vpack.c.b16 %v214, %v213
  %v232 = vpack.c.b16 %v216, %v215
  %249 = vmatprep.subr.bf16.mxu0 0
  %250 = vmatpush1.bf16.msra.mxu0 %v217
  %251 = vmatprep.subr.bf16.mxu0 0
  %252 = vmatpush1.bf16.msra.mxu0 %v218
  %253 = vmatprep.subr.bf16.mxu0 0
  %254 = vmatpush1.bf16.msra.mxu0 %v219
  %255 = vmatprep.subr.bf16.mxu0 0
  %256 = vmatpush1.bf16.msra.mxu0 %v220
  %257 = vmatprep.subr.bf16.mxu0 0
  %258 = vmatpush1.bf16.msra.mxu0 %v221
  %259 = vmatprep.subr.bf16.mxu0 0
  %260 = vmatpush1.bf16.msra.mxu0 %v222
  %261 = vmatprep.subr.bf16.mxu0 0
  %262 = vmatpush1.bf16.msra.mxu0 %v223
  %263 = vmatprep.subr.bf16.mxu0 0
  %264 = vmatpush1.bf16.msra.mxu0 %v224
  %265 = vmatprep.subr.bf16.mxu0 0
  %266 = vmatpush1.bf16.msra.mxu0 %v225
  %267 = vmatprep.subr.bf16.mxu0 0
  %268 = vmatpush1.bf16.msra.mxu0 %v226
  %269 = vmatprep.subr.bf16.mxu0 0
  %270 = vmatpush1.bf16.msra.mxu0 %v227
  %271 = vmatprep.subr.bf16.mxu0 0
  %272 = vmatpush1.bf16.msra.mxu0 %v228
  %273 = vmatprep.subr.bf16.mxu0 0
  %274 = vmatpush1.bf16.msra.mxu0 %v229
  %275 = vmatprep.subr.bf16.mxu0 0
  %276 = vmatpush1.bf16.msra.mxu0 %v230
  %277 = vmatprep.subr.bf16.mxu0 0
  %278 = vmatpush1.bf16.msra.mxu0 %v231
  %279 = vmatprep.subr.bf16.mxu0 0
  %280 = vmatpush1.bf16.msra.mxu0 %v232
  %281 = vmatprep.mubr.bf16.mxu0 %v113
  %282 = vmatmul.mubr.bf16.gmra.mrb[0].mxu0 %v112
  %v283 = vpop.f32.mrb[0].mxu0
  %v284 = vadd.f32 %v151, %v283
  %v285 = vpop.f32.mrb[0].mxu0
  %v286 = vpop.f32.mrb[0].mxu0
  %v287 = vpop.f32.mrb[0].mxu0
  %288 = vdwg.mxu0
  %v289 = vsub.f32 0.0, %v284
  %v290 = vmul.f32 %v289, 1.442695
  %v291 = vpow.pop %v290
  %v292 = vadd.f32 %v291, 1.0
  %v293 = vrcp.pop %v292
  %v294 = vmax.f32 %v284, 0.0
  %v295 = vand.u32 2147483647, %v284
  %v296 = vsub.f32 0.0, %v295
  %v297 = vmul.f32 %v296, 1.442695
  %v298 = vpow.pop %v297
  %v299 = vadd.f32 %v298, 1.0
  %v300 = vlog2.pop %v299
  %v301 = vmul.f32 %v300, 0.6931472
  %v302 = vmul.f32 -0.5, %v298
  %v303 = vadd.f32 %v302, 1.0
  %v304 = vmul.f32 %v303, %v298
  %v305 = vand.u32 2147483647, %v298
  %vm306 = vcmp.lt.f32.partialorder %v305, 0.0004427343
  %v307 = vsel %vm306, %v304, %v301
  %v308 = vadd.f32 %v294, %v307
  %v309 = vld [vmem:[%s1] sm:$0xff]
  %311 = vrot.lane.b32.xlu0 %v309, 127
  %v312 = vpop.permute.xlu0 %311
  %v314 = vadd.f32 %v309, %v312
  %v315 = vadd.f32 %v314, 1.0
  %v316 = vsub.f32 1.0, %v293
  %318 = vrot.lane.b32.xlu0 %v315, 2
  %v319 = vpop.permute.xlu0 %318
  %v321 = vsub.f32 %v309, %v319
  %323 = vrot.lane.b32.xlu0 %v321, 127
  %v324 = vpop.permute.xlu0 %323
  %v326 = vmul.f32 %v316, %v324
  %328 = vrot.lane.b32.xlu0 %v326, 127
  %v329 = vpop.permute.xlu0 %328
  %v331 = vadd.f32 %v315, %v329
  %v332 = vlaneseq
  %v333 = vand.u32 %v332, 127
  %vm334 = vcmp.eq.s32.totalorder %v333, 0
  %vm335 = vcmp.eq.s32.totalorder %v333, 1
  %337 = vset.pattern.permute.xlu0 0
  %338 = vperm.xlu0 %337, %v331
  %v339 = vpop.permute.xlu0 %338
  %v341 = vsel %vm335, %v339, %v308
  %v342 = vsel %vm334, %v293, %v341
  %vm343 = vcmask 23552
  %344 = vst.msk [vmem:[%s6] sm:$0xff] %vm343, %v342
  // Predicated region
  $region26: #{continuous_policy_head.1} parent=0 // pred_check
    _
  $region27: #{continuous_policy_head.1} parent=0 // pred_check_branch
    %346 = sbr.rel (0) target = $region29
  $region28: #{continuous_policy_head.1} parent=0 // pred_region
    _
  $region29: #{continuous_policy_head.1} parent=0 // pred_fallthru
    _
  // Predicated region
  $region30: #{continuous_policy_head.1} parent=0 // pred_check
    _
  $region31: #{continuous_policy_head.1} parent=0 // pred_check_branch
    %348 = sbr.rel (0) target = $region33
  $region32: #{continuous_policy_head.1} parent=0 // pred_region
    _
  $region33: #{continuous_policy_head.1} parent=0 // pred_fallthru
    _

</llo_original>
